<compile_context>
chip_gen: v7x
topology: tpu7x:2x2x1
jax: 0.10.0
libtpu: 0.0.40
codegen_flags: <defaults>
</compile_context>

<pallas_src>
import jax
import jax.numpy as jnp
from jax.experimental import pallas as pl
from jax.experimental.pallas import tpu as pltpu

HID_SIZE = 32      # hidden_size of _ScalarModel (must stay < LANES for the b2 fold)
LANES = 128        # pad hidden dim to one full vreg lane width
SUBLANES = 8       # pad parameter slab to one full (8, 128) f32 tile


def _scalar_model_kernel(p_ref, o_ref):
    """Fused Linear(1,H) -> ReLU -> Linear(H,1) on a ones(1,1) input, one batch elem.

    p_ref: (1, 8, 128) parameter slab for this grid step.
      row 0 = W1[:, 0] (zero-padded to 128 lanes)
      row 1 = b1       (zero-padded, sentinel 1.0 at lane HID_SIZE)
      row 2 = W2[0, :] (zero-padded, b2 at lane HID_SIZE)
      rows 3..7 = zero padding (tile alignment only).
    o_ref: (1, 1, 128) lane-dense output; the scalar result broadcast across lanes.
    """
    p = p_ref[0]                                     # (8, 128)
    w1 = p[0:1, :]                                   # (1, 128)
    b1 = p[1:2, :]                                   # (1, 128)
    w2 = p[2:3, :]                                   # (1, 128)
    # relu(ones(1,1) @ W1 + b1); padding lanes -> relu(0+0)=0, sentinel lane -> relu(1)=1
    h = jnp.maximum(w1 + b1, 0.0)                    # (1, 128), VPU
    # Lane dot: real lanes give h . w2, sentinel lane gives 1.0 * b2, pads give 0.
    y = jnp.sum(h * w2, axis=-1, keepdims=True)      # (1, 1), VPU mul + XLU reduce
    o_ref[...] = jnp.broadcast_to(y, o_ref.shape)    # unmasked lane-dense store


def init_params(key):
    """Deterministic stand-in for PyTorch nn.Linear default init U(-k, k), k=1/sqrt(fan_in)."""
    k1, k2, k3, k4 = jax.random.split(key, 4)
    # Layer 1: Linear(1, H) -> fan_in = 1 -> k = 1
    w1 = jax.random.uniform(k1, (HID_SIZE,), jnp.float32, -1.0, 1.0)   # weight[:, 0]
    b1 = jax.random.uniform(k2, (HID_SIZE,), jnp.float32, -1.0, 1.0)
    # Layer 2: Linear(H, 1) -> fan_in = H
    k = 1.0 / float(HID_SIZE) ** 0.5
    w2 = jax.random.uniform(k3, (HID_SIZE,), jnp.float32, -k, k)       # weight[0, :]
    b2 = jax.random.uniform(k4, (), jnp.float32, -k, k)
    return dict(w1=w1, b1=b1, w2=w2, b2=b2)


def pack_params(params):
    """Pack one parameter set into a (8, 128) lane-aligned slab with the b2 sentinel."""
    packed = jnp.zeros((SUBLANES, LANES), jnp.float32)
    packed = packed.at[0, :HID_SIZE].set(params['w1'])
    packed = packed.at[1, :HID_SIZE].set(params['b1'])
    packed = packed.at[2, :HID_SIZE].set(params['w2'])
    # Sentinel lane for the b2 fold: relu(0*w1 + 1.0) * b2 == b2 in the lane reduce.
    packed = packed.at[1, HID_SIZE].set(1.0)
    packed = packed.at[2, HID_SIZE].set(params['b2'])
    return packed


@jax.jit
def scalar_model_forward_batched(packed_params):
    """packed_params: (B, 8, 128) -> (B, 1) scalar outputs, one pallas_call total."""
    B = packed_params.shape[0]
    out = pl.pallas_call(
        _scalar_model_kernel,
        out_shape=jax.ShapeDtypeStruct((B, 1, LANES), jnp.float32),
        grid=(B,),
        in_specs=[pl.BlockSpec((1, SUBLANES, LANES), lambda b: (b, 0, 0))],
        out_specs=pl.BlockSpec((1, 1, LANES), lambda b: (b, 0, 0)),
        compiler_params=pltpu.CompilerParams(dimension_semantics=("parallel",)),
    )(packed_params)
    return out[:, 0, 0:1]                            # (B, 1)


def scalar_model_forward(packed_params):
    """Module-exact semantics: one parameter slab (8, 128) -> (1, 1) result."""
    return scalar_model_forward_batched(packed_params[None, ...])


def _reference(params):
    """Pure-JAX reference of _ScalarModel.forward()."""
    x = jnp.ones((1, 1), jnp.float32)
    h = jnp.maximum(x @ params['w1'][None, :] + params['b1'][None, :], 0.0)
    return h @ params['w2'][:, None] + params['b2']


if __name__ == "__main__":
    B = 4  # e.g. 4 independently-initialized _ScalarModel instances evaluated at once
    keys = jax.random.split(jax.random.PRNGKey(0), B)
    param_sets = [init_params(k) for k in keys]
    packed = jnp.stack([pack_params(p) for p in param_sets])   # (B, 8, 128)

    out_b = scalar_model_forward_batched(packed)
    jax.block_until_ready(out_b)
    assert out_b.shape == (B, 1) and out_b.dtype == jnp.float32

    ref_b = jnp.concatenate([_reference(p) for p in param_sets], axis=0)
    assert jnp.allclose(out_b, ref_b, atol=1e-5, rtol=1e-5), (out_b, ref_b)

    # Single-model path (exactly the module's forward() -> (1, 1) tensor).
    out1 = scalar_model_forward(packed[0])
    jax.block_until_ready(out1)
    assert out1.shape == (1, 1) and out1.dtype == jnp.float32
    assert jnp.allclose(out1, ref_b[0:1], atol=1e-5, rtol=1e-5), (out1, ref_b[0:1])

    print("KERNEL_OK")
</pallas_src>

<mosaic_0001>
module attributes {stable_mosaic.version = 11 : i64} {
  func.func @_scalar_model_kernel(%arg0: i32, %arg1: memref<1x8x128xf32, #tpu.memory_space<vmem>>, %arg2: memref<1x1x128xf32, #tpu.memory_space<vmem>>) attributes {dimension_semantics = [#tpu.dimension_semantics<parallel>], iteration_bounds = array<i64: 4>, scalar_prefetch = 0 : i64, scratch_operands = 0 : i64, tpu.core_type = #tpu.core_type<tc>, window_params = [{transform_indices = @transform_0, window_bounds = array<i64: 1, 8, 128>}, {transform_indices = @transform_1, window_bounds = array<i64: 1, 1, 128>}]} {
    %c0 = arith.constant 0 : index
    %c0_0 = arith.constant 0 : index
    %c0_1 = arith.constant 0 : index
    %0 = vector.load %arg1[%c0, %c0_0, %c0_1] : memref<1x8x128xf32, #tpu.memory_space<vmem>>, vector<1x8x128xf32>
    %1 = vector.shape_cast %0 : vector<1x8x128xf32> to vector<8x128xf32>
    %2 = vector.extract_strided_slice %1 {offsets = [0, 0], sizes = [1, 128], strides = [1, 1]} : vector<8x128xf32> to vector<1x128xf32>
    %3 = vector.extract_strided_slice %1 {offsets = [1, 0], sizes = [1, 128], strides = [1, 1]} : vector<8x128xf32> to vector<1x128xf32>
    %4 = vector.extract_strided_slice %1 {offsets = [2, 0], sizes = [1, 128], strides = [1, 1]} : vector<8x128xf32> to vector<1x128xf32>
    %5 = arith.addf %2, %3 : vector<1x128xf32>
    %cst = arith.constant 0.000000e+00 : f32
    %6 = vector.broadcast %cst : f32 to vector<1x128xf32>
    %7 = arith.maximumf %5, %6 : vector<1x128xf32>
    %8 = arith.mulf %7, %4 : vector<1x128xf32>
    %cst_2 = arith.constant dense<0.000000e+00> : vector<1xf32>
    %9 = vector.multi_reduction <add>, %8, %cst_2 [1] : vector<1x128xf32> to vector<1xf32>
    %10 = vector.shape_cast %9 : vector<1xf32> to vector<1x1xf32>
    %11 = vector.shape_cast %10 : vector<1x1xf32> to vector<1x1x1xf32>
    %12 = vector.broadcast %11 : vector<1x1x1xf32> to vector<1x1x128xf32>
    %c0_3 = arith.constant 0 : index
    %c0_4 = arith.constant 0 : index
    %c0_5 = arith.constant 0 : index
    %13 = vector.load %arg2[%c0_3, %c0_4, %c0_5] : memref<1x1x128xf32, #tpu.memory_space<vmem>>, vector<1x1x128xf32>
    tpu.vector_store %arg2[%c0_3, %c0_4, %c0_5], %12 {strides = array<i32>} : memref<1x1x128xf32, #tpu.memory_space<vmem>>, vector<1x1x128xf32>,
    return
  }
  func.func @transform_0(%arg0: i32) -> (i32, i32, i32) {
    %c0_i32 = arith.constant 0 : i32
    %c0_i32_0 = arith.constant 0 : i32
    %c0_i32_1 = arith.constant 0 : i32
    return %arg0, %c0_i32, %c0_i32_0 : i32, i32, i32
  }
  func.func @transform_1(%arg0: i32) -> (i32, i32, i32) {
    %c0_i32 = arith.constant 0 : i32
    %c0_i32_0 = arith.constant 0 : i32
    %c0_i32_1 = arith.constant 0 : i32
    return %arg0, %c0_i32, %c0_i32_0 : i32, i32, i32
  }
}

</mosaic_0001>

<llo_original>
// kernel: scalar_model_forward_batched.1
$region0: #{scalar_model_forward_batched.1}
  #allocation0 [shape = 'u32[]', space=smem, size = 0x4, offset = 0x4, fixed_abs, tag = 'smem constant byte address 0x4 - core index']
  #allocation1 [shape = 'u32[144,128]{1,0:T(1,128)}', space=vmem, size = 0x12000, scoped, tag = 'internal scratch']
  %s0 = inlined_call_operand.hbm [shape: f32[4,8,128], index: 0, kind: input, shape index: {}]
  %s1 = inlined_call_operand.vmem [shape: f32[4,1,128], index: 1, kind: output, shape index: {}]
  %s2 = sld [smem:[#allocation0]]
  $region41: #{scalar_model_forward_batched.1} parent=0
    _
  %s4 = ssub.s32 1, %s2
  %s5 = scalar_select 0, %s4, %s2
  $region1: #{scalar_model_forward_batched.1} parent=0
    #allocation2 [shape = 'u8[8192]{0}', space=vmem, size = 0x2000, scoped, tag = 'input window, operand 0']
    #allocation3 [shape = 's32[2]{0}', space=sflag, size = 0x8, scoped, tag = 'scoped memory for scalar_model_forward_batched.1']
    %6 = vsyncpa [#allocation3], 0
    %s7 = scalar_lea.sflag [#allocation3], 1
    %8 = vsyncpa %s7, 0
    loop: start=0, step=1, limit=6
    $region2: #{scalar_model_forward_batched.1} parent=1 // loop_pre_header
      _
    $region3: #{scalar_model_forward_batched.1} parent=1 // loop_header
      %s10 = sphi 0, %s14
      %p11 = scmp.ge.s32.totalorder %s10, 6
      %s20 = sphi 0, %s22
      %s23 = sphi 0, %s20
      %s24 = sphi 0, %s23
      %s40 = sphi 0, %s24
      %s46 = sphi 0, %s48
      %s49 = sphi 0, %s46
      %s50 = sphi 0, %s49
      %s66 = sphi 0, %s50
    $region4: #{scalar_model_forward_batched.1} parent=1 // loop_header_branch
      %13 = sbr.rel (%p11) target = $region8
    $region5: #{scalar_model_forward_batched.1} parent=1 // loop_body
      %s15 = ssub.s32 %s10, 1
      %s16 = ssub.s32 %s10, 2
      %s17 = sadd.s32 %s10, 1
      %s18 = ssub.s32 %s10, %s17
      %p19 = scmp.eq.s32.totalorder %s18, 0
      %s21 = sadd.s32 %s20, 1
      %s22 = scalar_select %p19, %s20, %s21
      %p25 = pneg %p19
      %p26 = scmp.eq.s32.totalorder %s10, 3
      %p27 = por %p25, %p26
      %p28 = scmp.ne.s32.totalorder %s20, %s23
      %p29 = scmp.eq.s32.totalorder %s10, 0
      %p30 = por %p28, %p29
      %p31 = scmp.ne.s32.totalorder %s20, %s23
      %p32 = scmp.eq.s32.totalorder %s15, 3
      %p33 = por %p31, %p32
      %p34 = scmp.ne.s32.totalorder %s23, %s24
      %p35 = scmp.eq.s32.totalorder %s15, 0
      %p36 = por %p34, %p35
      %p37 = scmp.ne.s32.totalorder %s23, %s24
      %p38 = scmp.eq.s32.totalorder %s16, 3
      %p39 = por %p37, %p38
      %p41 = scmp.ne.s32.totalorder %s24, %s40
      %p42 = scmp.eq.s32.totalorder %s16, 0
      %p43 = por %p41, %p42
      %s44 = ssub.s32 %s10, %s17
      %p45 = scmp.eq.s32.totalorder %s44, 0
      %s47 = sadd.s32 %s46, 1
      %s48 = scalar_select %p45, %s46, %s47
      %p51 = pneg %p45
      %p52 = scmp.eq.s32.totalorder %s10, 3
      %p53 = por %p51, %p52
      %p54 = scmp.ne.s32.totalorder %s46, %s49
      %p55 = scmp.eq.s32.totalorder %s10, 0
      %p56 = por %p54, %p55
      %p57 = scmp.ne.s32.totalorder %s46, %s49
      %p58 = scmp.eq.s32.totalorder %s15, 3
      %p59 = por %p57, %p58
      %p60 = scmp.ne.s32.totalorder %s49, %s50
      %p61 = scmp.eq.s32.totalorder %s15, 0
      %p62 = por %p60, %p61
      %p63 = scmp.ne.s32.totalorder %s49, %s50
      %p64 = scmp.eq.s32.totalorder %s16, 3
      %p65 = por %p63, %p64
      %p67 = scmp.ne.s32.totalorder %s50, %s66
      %p68 = scmp.eq.s32.totalorder %s16, 0
      %p69 = por %p67, %p68
      %p70 = scmp.le.s32.totalorder 1, %s10
      %p71 = scmp.lt.s32.totalorder %s10, 5
      %p72 = pnand %p70, %p71
      %p73 = pneg %p72
      // Predicated region
      $region9: #{scalar_model_forward_batched.1} parent=5 // pred_check
        _
      $region10: #{scalar_model_forward_batched.1} parent=5 // pred_check_branch
        %75 = sbr.rel (%p72) target = $region12
      $region11: #{scalar_model_forward_batched.1} parent=5 // pred_region
        %s76 = ssub.s32 %s10, 1
      $region12: #{scalar_model_forward_batched.1} parent=5 // pred_fallthru
        _
      %p77 = scmp.lt.s32.totalorder %s10, 4
      // Predicated region
      $region13: #{scalar_model_forward_batched.1} parent=5 // pred_check
        %p78 = pneg %p77
      $region14: #{scalar_model_forward_batched.1} parent=5 // pred_check_branch
        %80 = sbr.rel (%p78) target = $region16
      $region15: #{scalar_model_forward_batched.1} parent=5 // pred_region
        // Predicated region
        $region17: #{scalar_model_forward_batched.1} parent=15 // pred_check
          %p81 = pneg %p30
        $region18: #{scalar_model_forward_batched.1} parent=15 // pred_check_branch
          %83 = sbr.rel (%p81) target = $region20
        $region19: #{scalar_model_forward_batched.1} parent=15 // pred_region
          %s84 = sand.u32 %s20, 1
          %s85 = scalar_lea.sflag [#allocation3], %s84
          %s86 = sand.u32 %s20, 1
          %s87 = smul.addr %s86, 8
          %s88 = scalar_lea.vmem [#allocation2], %s87
          %s90 = ssub.s32 128, 128
          %91 = vsyncadd %s85, %s90
          %s92 = smul.addr %s10, 128
          %s93 = scalar_lea.hbm %s0, %s92
          %s95 = sshll.u32 %s88, 4
          %s96 = int_to_ptr.vmem [resolvable:$true] %s95
          %98 = dma.hbm_to_vmem [thread:$0]  %s93, 128, %s96, %s85
        $region20: #{scalar_model_forward_batched.1} parent=15 // pred_fallthru
          _
      $region16: #{scalar_model_forward_batched.1} parent=5 // pred_fallthru
        _
      %p99 = scmp.le.s32.totalorder 1, %s10
      %p100 = scmp.lt.s32.totalorder %s10, 5
      %p101 = pnand %p99, %p100
      %p102 = pneg %p101
      // Predicated region
      $region21: #{scalar_model_forward_batched.1} parent=5 // pred_check
        _
      $region22: #{scalar_model_forward_batched.1} parent=5 // pred_check_branch
        %104 = sbr.rel (%p101) target = $region24
      $region23: #{scalar_model_forward_batched.1} parent=5 // pred_region
        %s105 = ssub.s32 %s10, 1
        %s106 = sand.u32 %s23, 1
        %s107 = scalar_lea.sflag [#allocation3], %s106
        %s108 = sand.u32 %s23, 1
        %s109 = smul.addr %s108, 8
        %s110 = scalar_lea.vmem [#allocation2], %s109
        // Predicated region
        $region25: #{scalar_model_forward_batched.1} parent=23 // pred_check
          %p111 = pneg %p36
        $region26: #{scalar_model_forward_batched.1} parent=23 // pred_check_branch
          %113 = sbr.rel (%p111) target = $region28
        $region27: #{scalar_model_forward_batched.1} parent=23 // pred_region
          %114 = dma.done %s107, 128
        $region28: #{scalar_model_forward_batched.1} parent=23 // pred_fallthru
          _
        %s115 = sand.u32 %s23, 1
        %s116 = scalar_lea.sflag [#allocation3], %s115
        %s117 = sand.u32 %s23, 1
        %s118 = smul.addr %s117, 8
        %s119 = scalar_lea.vmem [#allocation2], %s118
        %p120 = pneg %p36
        %p121 = pneg %p33
        %p122 = pneg %p62
        %p123 = pneg %p59
        %p124 = scmp.lt.s32.totalorder %s15, 3
        %s125 = scalar_select %p124, %s15, 3
        %s126 = scalar_lea.vmem %s1, %s125
        %p127 = scmp.lt.s32.totalorder %s15, 3
        %s128 = scalar_select %p127, %s15, 3
        %s129 = scalar_lea.vmem %s1, %s128
        %v130 = vld [vmem:[%s110] sm:$0xff]
        %v132 = vrot.slane %v130, 1
        %v134 = vadd.f32 %v130, %v132
        %v135 = vmax.f32 %v134, 0.0
        %v136 = vrot.slane %v130, 2
        %v138 = vmul.f32 %v135, %v136
        %vm139 = vcmask 1040384
        %v140 = vsel %vm139, %v138, 0.0
        %141 = vadd.xlane.f32.xlu0 %v140
        %v142 = vpop.xlane.xlu0 %141
        %143 = vst [vmem:[%s129] sm:$0x1] %v142
        %p144 = scmp.lt.s32.totalorder %s15, 3
        %s145 = scalar_select %p144, %s15, 3
        %s146 = scalar_lea.vmem %s1, %s145
        // Predicated region
        $region29: #{scalar_model_forward_batched.1} parent=23 // pred_check
          %p147 = pneg %p59
        $region30: #{scalar_model_forward_batched.1} parent=23 // pred_check_branch
          %149 = sbr.rel (%p147) target = $region32
        $region31: #{scalar_model_forward_batched.1} parent=23 // pred_region
          _
        $region32: #{scalar_model_forward_batched.1} parent=23 // pred_fallthru
          _
      $region24: #{scalar_model_forward_batched.1} parent=5 // pred_fallthru
        _
      %p150 = scmp.le.s32.totalorder 2, %s10
      // Predicated region
      $region33: #{scalar_model_forward_batched.1} parent=5 // pred_check
        %p151 = pneg %p150
      $region34: #{scalar_model_forward_batched.1} parent=5 // pred_check_branch
        %153 = sbr.rel (%p151) target = $region36
      $region35: #{scalar_model_forward_batched.1} parent=5 // pred_region
        %s154 = ssub.s32 %s10, 2
        // Predicated region
        $region37: #{scalar_model_forward_batched.1} parent=35 // pred_check
          %p155 = pneg %p65
        $region38: #{scalar_model_forward_batched.1} parent=35 // pred_check_branch
          %157 = sbr.rel (%p155) target = $region40
        $region39: #{scalar_model_forward_batched.1} parent=35 // pred_region
          %p158 = scmp.lt.s32.totalorder %s16, 3
          %s159 = scalar_select %p158, %s16, 3
          %s160 = scalar_lea.vmem %s1, %s159
        $region40: #{scalar_model_forward_batched.1} parent=35 // pred_fallthru
          _
      $region36: #{scalar_model_forward_batched.1} parent=5 // pred_fallthru
        _
    $region6: #{scalar_model_forward_batched.1} parent=1 // loop_footer
      %s14 = sadd.s32 1, %s10
    $region7: #{scalar_model_forward_batched.1} parent=1 // loop_footer_branch
      %9 = sbr.rel target = $region3
    $region8: #{scalar_model_forward_batched.1} parent=1 // loop_exit
      _
    %161 = vsyncpa [#allocation3], 1
    %s162 = scalar_lea.sflag [#allocation3], 1
    %163 = vsyncpa %s162, 1

</llo_original>
